<compile_context>
chip_gen: v7x
topology: tpu7x:2x2x1
jax: 0.10.0
libtpu: 0.0.40
codegen_flags: <defaults>
</compile_context>

<pallas_src>
import functools
import math

import jax
import jax.numpy as jnp
import numpy as np
from jax.experimental import pallas as pl
from jax.experimental.pallas import tpu as pltpu


# ----------------------------------------------------------------------------
# Small helpers
# ----------------------------------------------------------------------------
def _ceil_to(x, m):
    return -(-x // m) * m


def _padded_bytes(shape, dtype):
    """Approximate VMEM bytes of a block, accounting for (8, 128) tiling."""
    s = list(shape)
    if len(s) >= 1:
        s[-1] = _ceil_to(s[-1], 128)
    if len(s) >= 2:
        s[-2] = _ceil_to(s[-2], 8)
    n = 1
    for d in s:
        n *= max(int(d), 1)
    return n * np.dtype(dtype).itemsize


def _pick_tile(size, target):
    """Largest multiple of 8 that divides `size` and is <= target (else size)."""
    if size <= target:
        return size
    t = (min(target, size) // 8) * 8
    while t >= 8:
        if size % t == 0:
            return t
        t -= 8
    return size


def _vmem_limit(estimate_bytes):
    return min(max(int(estimate_bytes * 1.5) + (4 << 20), 32 << 20), 60 << 20)


# ----------------------------------------------------------------------------
# Kernel 1: fused QKV projection  (x @ [Wq|Wk|Wv] + b), head-major outputs
# ----------------------------------------------------------------------------
def _qkv_proj_kernel(x_ref, wqkv_ref, bqkv_ref, q_ref, k_ref, v_ref, *,
                     num_heads, head_dim):
    H = num_heads * head_dim
    x = x_ref[0]                                              # (rt, H)
    rt = x.shape[0]

    qkv = jnp.dot(x, wqkv_ref[...],
                  preferred_element_type=jnp.float32) + bqkv_ref[...]

    def heads(m):                                             # (rt,H)->(nh,rt,hd)
        return jnp.transpose(m.reshape(rt, num_heads, head_dim), (1, 0, 2))

    q_ref[0] = heads(qkv[:, :H]).astype(q_ref.dtype)          # scale pre-folded
    k_ref[0] = heads(qkv[:, H:2 * H]).astype(k_ref.dtype)
    v_ref[0] = heads(qkv[:, 2 * H:]).astype(v_ref.dtype)


# ----------------------------------------------------------------------------
# Kernel 2: flash attention + fused output projection
# ----------------------------------------------------------------------------
def _flash_attn_kernel(q_ref, k_ref, v_ref, wo3_ref, bo_ref, o_ref,
                       m_sc, l_sc, acc_sc, *, bf16_exp, approx_recip):
    ki = pl.program_id(2)

    @pl.when(ki == 0)
    def _init():
        m_sc[...] = jnp.full_like(m_sc, -jnp.inf)
        l_sc[...] = jnp.zeros_like(l_sc)
        acc_sc[...] = jnp.zeros_like(acc_sc)

    q = q_ref[0]                                              # (nh, tq, hd)
    k = k_ref[0]                                              # (nh, tk, hd)
    v = v_ref[0]                                              # (nh, tk, hd)

    # Scores for this (q_tile, kv_tile) block; contraction over head_dim.
    s = jnp.einsum("hqd,hkd->hqk", q, k,
                   preferred_element_type=jnp.float32)        # (nh, tq, tk) f32

    m_prev = m_sc[...]
    m_new = jnp.maximum(m_prev, jnp.max(s, axis=-1, keepdims=True))
    alpha = jnp.exp(m_prev - m_new)

    if bf16_exp:
        # bf16 EUP exp (v6e/v7x); also removes the p f32->bf16 cast before PV.
        p = jnp.exp((s - m_new).astype(jnp.bfloat16))
        l_cur = jnp.sum(p, axis=-1, keepdims=True, dtype=jnp.float32)
    else:
        p = jnp.exp(s - m_new)
        l_cur = jnp.sum(p, axis=-1, keepdims=True)

    l_sc[...] = alpha * l_sc[...] + l_cur
    acc_sc[...] = alpha * acc_sc[...] + jnp.einsum(
        "hqk,hkd->hqd", p.astype(v.dtype), v,
        preferred_element_type=jnp.float32)
    m_sc[...] = m_new

    @pl.when(ki == pl.num_programs(2) - 1)
    def _finalize():
        if approx_recip:
            ctx = acc_sc[...] * pl.reciprocal(l_sc[...], approx=True)
        else:
            ctx = acc_sc[...] / l_sc[...]                     # exact (f32 path)
        # Per-head batched matmul against Wo[(h), hd, H] + head-sum:
        # avoids the (nh, tq, hd) -> (tq, H) transpose / relayout.
        out_h = jnp.einsum("hqd,hdo->hqo", ctx.astype(wo3_ref.dtype),
                           wo3_ref[...], preferred_element_type=jnp.float32)
        out = jnp.sum(out_h, axis=0) + bo_ref[...]
        # TODO(synk): proj_dropout not applied (eval mode).
        o_ref[0] = out.astype(o_ref.dtype)


# ----------------------------------------------------------------------------
# Wrappers
# ----------------------------------------------------------------------------
def pack_attention_params(params, num_heads, compute_dtype=jnp.float32):
    """One-time packing of weights (call once at init, NOT per forward)."""
    H = params["wq"].shape[0]
    assert H % num_heads == 0
    head_dim = H // num_heads
    cdt = np.dtype(compute_dtype)
    scale = 1.0 / math.sqrt(head_dim)

    # Fold softmax 1/sqrt(hd) into the Q projection; pack Q|K|V columns.
    wqkv = jnp.concatenate([params["wq"] * scale, params["wk"], params["wv"]],
                           axis=1).astype(cdt)                # (H, 3H)
    bqkv = jnp.concatenate([params["bq"] * scale, params["bk"], params["bv"]],
                           axis=1).astype(jnp.float32)        # (1, 3H)
    wo3 = params["wo"].reshape(num_heads, head_dim, H).astype(cdt)  # (nh,hd,H)
    bo = params["bo"].astype(jnp.float32)                     # (1, H)

    return dict(wqkv=wqkv, bqkv=bqkv, wo3=wo3, bo=bo,
                num_heads=num_heads, head_dim=head_dim, compute_dtype=cdt)


def _qkv_projection(x, packed, row_tile):
    B, S, H = x.shape
    nh, hd = packed["num_heads"], packed["head_dim"]
    cdt = packed["compute_dtype"]
    wqkv, bqkv = packed["wqkv"], packed["bqkv"]

    kernel = functools.partial(_qkv_proj_kernel, num_heads=nh, head_dim=hd)
    qkv_shape = jax.ShapeDtypeStruct((B, nh, S, hd), cdt)

    vmem = (2 * _padded_bytes((1, row_tile, H), cdt)              # x
            + 2 * _padded_bytes((H, 3 * H), cdt)                  # Wqkv
            + 2 * _padded_bytes((1, 3 * H), jnp.float32)          # bqkv
            + 6 * _padded_bytes((1, nh, row_tile, hd), cdt)       # q,k,v out
            + _padded_bytes((row_tile, 3 * H), jnp.float32))      # f32 qkv tmp

    cost = pl.CostEstimate(
        flops=2 * B * S * H * 3 * H,
        transcendentals=0,
        bytes_accessed=int(B * S * H * cdt.itemsize
                           + 3 * H * H * cdt.itemsize
                           + 3 * B * nh * S * hd * cdt.itemsize))

    return pl.pallas_call(
        kernel,
        out_shape=(qkv_shape, qkv_shape, qkv_shape),
        grid_spec=pltpu.PrefetchScalarGridSpec(
            num_scalar_prefetch=0,
            grid=(B, S // row_tile),
            in_specs=[
                pl.BlockSpec((1, row_tile, H), lambda b, r: (b, r, 0)),
                # TODO(synk): column-tile Wqkv over a third grid axis for
                # production H that cannot sit resident in v7x VMEM.
                pl.BlockSpec((H, 3 * H), lambda b, r: (0, 0)),
                pl.BlockSpec((1, 3 * H), lambda b, r: (0, 0)),
            ],
            out_specs=[
                pl.BlockSpec((1, nh, row_tile, hd), lambda b, r: (b, 0, r, 0)),
                pl.BlockSpec((1, nh, row_tile, hd), lambda b, r: (b, 0, r, 0)),
                pl.BlockSpec((1, nh, row_tile, hd), lambda b, r: (b, 0, r, 0)),
            ],
        ),
        compiler_params=pltpu.CompilerParams(
            dimension_semantics=("parallel", "parallel"),
            vmem_limit_bytes=_vmem_limit(vmem)),
        cost_estimate=cost,
    )(x, wqkv, bqkv)


def _flash_attention(q, k, v, packed, out_dtype, q_tile, kv_tile):
    B, nh, S, hd = q.shape
    H = nh * hd
    cdt = packed["compute_dtype"]
    wo3, bo = packed["wo3"], packed["bo"]
    is_bf16 = cdt == jnp.bfloat16

    kernel = functools.partial(_flash_attn_kernel,
                               bf16_exp=is_bf16, approx_recip=is_bf16)

    vmem = (2 * _padded_bytes((1, nh, q_tile, hd), cdt)           # q
            + 4 * _padded_bytes((1, nh, kv_tile, hd), cdt)        # k, v
            + 2 * _padded_bytes((nh, hd, H), cdt)                 # Wo3
            + 2 * _padded_bytes((1, H), jnp.float32)              # bo
            + 2 * _padded_bytes((1, q_tile, H), out_dtype)        # out
            + 2 * _padded_bytes((nh, q_tile, 1), jnp.float32)     # m, l
            + _padded_bytes((nh, q_tile, hd), jnp.float32)        # acc
            + 2 * _padded_bytes((nh, q_tile, kv_tile), jnp.float32)  # s, p
            + _padded_bytes((nh, q_tile, H), jnp.float32))        # out_h tmp

    num_q_tiles = S // q_tile
    cost = pl.CostEstimate(
        flops=int(4 * B * nh * S * S * hd + 2 * B * S * H * H),
        transcendentals=int(B * nh * S * S),
        bytes_accessed=int((1 + 2 * num_q_tiles) * B * nh * S * hd * cdt.itemsize
                           + nh * hd * H * cdt.itemsize
                           + B * S * H * np.dtype(out_dtype).itemsize))

    return pl.pallas_call(
        kernel,
        out_shape=jax.ShapeDtypeStruct((B, S, H), out_dtype),
        grid_spec=pltpu.PrefetchScalarGridSpec(
            num_scalar_prefetch=0,
            grid=(B, S // q_tile, S // kv_tile),
            in_specs=[
                pl.BlockSpec((1, nh, q_tile, hd),
                             lambda b, qi, ki: (b, 0, qi, 0)),
                pl.BlockSpec((1, nh, kv_tile, hd),
                             lambda b, qi, ki: (b, 0, ki, 0)),
                pl.BlockSpec((1, nh, kv_tile, hd),
                             lambda b, qi, ki: (b, 0, ki, 0)),
                pl.BlockSpec((nh, hd, H), lambda b, qi, ki: (0, 0, 0)),
                pl.BlockSpec((1, H), lambda b, qi, ki: (0, 0)),
            ],
            out_specs=pl.BlockSpec((1, q_tile, H),
                                   lambda b, qi, ki: (b, qi, 0)),
            scratch_shapes=[
                pltpu.VMEM((nh, q_tile, 1), jnp.float32),          # m
                pltpu.VMEM((nh, q_tile, 1), jnp.float32),          # l
                pltpu.VMEM((nh, q_tile, hd), jnp.float32),         # acc
            ],
        ),
        compiler_params=pltpu.CompilerParams(
            dimension_semantics=("parallel", "parallel", "arbitrary"),
            vmem_limit_bytes=_vmem_limit(vmem)),
        cost_estimate=cost,
    )(q, k, v, wo3, bo)


def attention_forward(hidden_states, packed, *, q_tile=None, kv_tile=None,
                      row_tile=None):
    """hidden_states: (B, S, H). packed: output of pack_attention_params()."""
    B, S, H = hidden_states.shape
    nh, hd = packed["num_heads"], packed["head_dim"]
    assert nh * hd == H
    cdt = packed["compute_dtype"]

    if row_tile is None:
        row_tile = _pick_tile(S, 256)
    if q_tile is None:
        q_tile = _pick_tile(S, 256)
        # v7x has 2 TensorCores: keep at least 2 parallel grid points.
        if B * (S // q_tile) < 2 and S % 16 == 0:
            q_tile = S // 2
    if kv_tile is None:
        kv_tile = _pick_tile(S, 512)
    assert S % row_tile == 0 and S % q_tile == 0 and S % kv_tile == 0

    x = hidden_states.astype(cdt)
    q, k, v = _qkv_projection(x, packed, row_tile)
    return _flash_attention(q, k, v, packed, hidden_states.dtype,
                            q_tile, kv_tile)


# ----------------------------------------------------------------------------
# Pure-JAX reference (matches the PyTorch forward, eval mode) + init
# ----------------------------------------------------------------------------
def _reference(hidden_states, params, num_heads):
    B, S, H = hidden_states.shape
    hd = H // num_heads
    x = hidden_states

    def lin(x, w, b):
        return jnp.einsum("bsh,ho->bso", x, w) + b[0]

    q = lin(x, params["wq"], params["bq"]).reshape(B, S, num_heads, hd).transpose(0, 2, 1, 3)
    k = lin(x, params["wk"], params["bk"]).reshape(B, S, num_heads, hd).transpose(0, 2, 1, 3)
    v = lin(x, params["wv"], params["bv"]).reshape(B, S, num_heads, hd).transpose(0, 2, 1, 3)

    scores = jnp.einsum("bhqd,bhkd->bhqk", q, k) / math.sqrt(hd)
    probs = jax.nn.softmax(scores, axis=-1)
    ctx = jnp.einsum("bhqk,bhkd->bhqd", probs, v)
    ctx = ctx.transpose(0, 2, 1, 3).reshape(B, S, H)
    return lin(ctx, params["wo"], params["bo"])


def make_params(key, hidden_size):
    keys = jax.random.split(key, 8)
    bound = 1.0 / math.sqrt(hidden_size)

    def w(k):
        return jax.random.uniform(k, (hidden_size, hidden_size),
                                  jnp.float32, -bound, bound)

    def b(k):
        return jax.random.uniform(k, (1, hidden_size),
                                  jnp.float32, -bound, bound)

    return {
        "wq": w(keys[0]), "bq": b(keys[1]),
        "wk": w(keys[2]), "bk": b(keys[3]),
        "wv": w(keys[4]), "bv": b(keys[5]),
        "wo": w(keys[6]), "bo": b(keys[7]),
    }


if __name__ == "__main__":
    key = jax.random.PRNGKey(0)
    k_x1, k_p1, k_x2, k_p2 = jax.random.split(key, 4)

    # --- Test 1: spec-sized toy shapes, f32 end-to-end, single kv tile. ------
    B, S, H, NUM_HEADS = 2, 8, 32, 4
    x1 = jax.random.normal(k_x1, (B, S, H), jnp.float32)
    p1 = make_params(k_p1, H)
    packed1 = pack_attention_params(p1, NUM_HEADS, compute_dtype=jnp.float32)
    out1 = jax.block_until_ready(attention_forward(x1, packed1))
    ref1 = _reference(x1, p1, NUM_HEADS)
    assert out1.shape == (B, S, H)
    assert jnp.allclose(out1, ref1, atol=2e-3, rtol=2e-3), "f32 mismatch"

    # --- Test 2: lane-dense H, bf16 MXU path, q-tiled + multi-kv-tile flash. -
    B2, S2, H2, NH2 = 2, 256, 128, 4
    x2 = jax.random.normal(k_x2, (B2, S2, H2), jnp.float32)
    p2 = make_params(k_p2, H2)
    packed2 = pack_attention_params(p2, NH2, compute_dtype=jnp.bfloat16)
    out2 = jax.block_until_ready(
        attention_forward(x2, packed2, q_tile=128, kv_tile=128))
    ref2 = _reference(x2, p2, NH2)
    assert out2.shape == (B2, S2, H2)
    assert jnp.allclose(out2, ref2, atol=5e-2, rtol=5e-2), "bf16 mismatch"

    print("KERNEL_OK")
</pallas_src>

<mosaic_0001>
module attributes {stable_mosaic.version = 11 : i64} {
  func.func @_qkv_proj_kernel(%arg0: i32, %arg1: i32, %arg2: memref<1x8x32xf32, #tpu.memory_space<vmem>>, %arg3: memref<32x96xf32, #tpu.memory_space<vmem>>, %arg4: memref<1x96xf32, #tpu.memory_space<vmem>>, %arg5: memref<1x4x8x8xf32, #tpu.memory_space<vmem>>, %arg6: memref<1x4x8x8xf32, #tpu.memory_space<vmem>>, %arg7: memref<1x4x8x8xf32, #tpu.memory_space<vmem>>) attributes {dimension_semantics = [#tpu.dimension_semantics<parallel>, #tpu.dimension_semantics<parallel>], iteration_bounds = array<i64: 2, 1>, scalar_prefetch = 0 : i64, scratch_operands = 0 : i64, tpu.core_type = #tpu.core_type<tc>, window_params = [{transform_indices = @transform_0, window_bounds = array<i64: 1, 8, 32>}, {pipeline_mode = #tpu.pipeline_mode<synchronous>, transform_indices = @transform_1, window_bounds = array<i64: 32, 96>}, {pipeline_mode = #tpu.pipeline_mode<synchronous>, transform_indices = @transform_2, window_bounds = array<i64: 1, 96>}, {transform_indices = @transform_3, window_bounds = array<i64: 1, 4, 8, 8>}, {transform_indices = @transform_4, window_bounds = array<i64: 1, 4, 8, 8>}, {transform_indices = @transform_5, window_bounds = array<i64: 1, 4, 8, 8>}]} {
    %c0 = arith.constant 0 : index
    %c0_0 = arith.constant 0 : index
    %c0_1 = arith.constant 0 : index
    %0 = vector.load %arg2[%c0, %c0_0, %c0_1] : memref<1x8x32xf32, #tpu.memory_space<vmem>>, vector<1x8x32xf32>
    %1 = vector.shape_cast %0 : vector<1x8x32xf32> to vector<8x32xf32>
    %c0_2 = arith.constant 0 : index
    %c0_3 = arith.constant 0 : index
    %2 = vector.load %arg3[%c0_2, %c0_3] : memref<32x96xf32, #tpu.memory_space<vmem>>, vector<32x96xf32>
    %cst = arith.constant dense<0.000000e+00> : vector<8x96xf32>
    %3 = tpu.matmul %1, %2, %cst {dimension_numbers = #tpu.dot_dimension_numbers<[1], [0], [0], [1], [0, 0, 1, 1], [], []>} : vector<8x32xf32>, vector<32x96xf32>, vector<8x96xf32> -> vector<8x96xf32>
    %c0_4 = arith.constant 0 : index
    %c0_5 = arith.constant 0 : index
    %4 = vector.load %arg4[%c0_4, %c0_5] : memref<1x96xf32, #tpu.memory_space<vmem>>, vector<1x96xf32>
    %5 = vector.broadcast %4 : vector<1x96xf32> to vector<8x96xf32>
    %6 = arith.addf %3, %5 : vector<8x96xf32>
    %7 = vector.extract_strided_slice %6 {offsets = [0, 0], sizes = [8, 32], strides = [1, 1]} : vector<8x96xf32> to vector<8x32xf32>
    %8 = vector.shape_cast %7 : vector<8x32xf32> to vector<8x4x8xf32>
    %9 = tpu.transpose %8, [1, 0, 2] : vector<8x4x8xf32> -> vector<4x8x8xf32>
    %c0_6 = arith.constant 0 : index
    %c0_7 = arith.constant 0 : index
    %c0_8 = arith.constant 0 : index
    %c0_9 = arith.constant 0 : index
    %10 = vector.load %arg5[%c0_6, %c0_7, %c0_8, %c0_9] : memref<1x4x8x8xf32, #tpu.memory_space<vmem>>, vector<1x4x8x8xf32>
    %11 = vector.shape_cast %10 : vector<1x4x8x8xf32> to vector<4x8x8xf32>
    %12 = vector.shape_cast %9 : vector<4x8x8xf32> to vector<1x4x8x8xf32>
    tpu.vector_store %arg5[%c0_6, %c0_7, %c0_8, %c0_9], %12 {strides = array<i32>} : memref<1x4x8x8xf32, #tpu.memory_space<vmem>>, vector<1x4x8x8xf32>,
    %13 = vector.extract_strided_slice %6 {offsets = [0, 32], sizes = [8, 32], strides = [1, 1]} : vector<8x96xf32> to vector<8x32xf32>
    %14 = vector.shape_cast %13 : vector<8x32xf32> to vector<8x4x8xf32>
    %15 = tpu.transpose %14, [1, 0, 2] : vector<8x4x8xf32> -> vector<4x8x8xf32>
    %c0_10 = arith.constant 0 : index
    %c0_11 = arith.constant 0 : index
    %c0_12 = arith.constant 0 : index
    %c0_13 = arith.constant 0 : index
    %16 = vector.load %arg6[%c0_10, %c0_11, %c0_12, %c0_13] : memref<1x4x8x8xf32, #tpu.memory_space<vmem>>, vector<1x4x8x8xf32>
    %17 = vector.shape_cast %16 : vector<1x4x8x8xf32> to vector<4x8x8xf32>
    %18 = vector.shape_cast %15 : vector<4x8x8xf32> to vector<1x4x8x8xf32>
    tpu.vector_store %arg6[%c0_10, %c0_11, %c0_12, %c0_13], %18 {strides = array<i32>} : memref<1x4x8x8xf32, #tpu.memory_space<vmem>>, vector<1x4x8x8xf32>,
    %19 = vector.extract_strided_slice %6 {offsets = [0, 64], sizes = [8, 32], strides = [1, 1]} : vector<8x96xf32> to vector<8x32xf32>
    %20 = vector.shape_cast %19 : vector<8x32xf32> to vector<8x4x8xf32>
    %21 = tpu.transpose %20, [1, 0, 2] : vector<8x4x8xf32> -> vector<4x8x8xf32>
    %c0_14 = arith.constant 0 : index
    %c0_15 = arith.constant 0 : index
    %c0_16 = arith.constant 0 : index
    %c0_17 = arith.constant 0 : index
    %22 = vector.load %arg7[%c0_14, %c0_15, %c0_16, %c0_17] : memref<1x4x8x8xf32, #tpu.memory_space<vmem>>, vector<1x4x8x8xf32>
    %23 = vector.shape_cast %22 : vector<1x4x8x8xf32> to vector<4x8x8xf32>
    %24 = vector.shape_cast %21 : vector<4x8x8xf32> to vector<1x4x8x8xf32>
    tpu.vector_store %arg7[%c0_14, %c0_15, %c0_16, %c0_17], %24 {strides = array<i32>} : memref<1x4x8x8xf32, #tpu.memory_space<vmem>>, vector<1x4x8x8xf32>,
    return
  }
  func.func @transform_0(%arg0: i32, %arg1: i32) -> (i32, i32, i32) {
    %c0_i32 = arith.constant 0 : i32
    %c0_i32_0 = arith.constant 0 : i32
    return %arg0, %arg1, %c0_i32 : i32, i32, i32
  }
  func.func @transform_1(%arg0: i32, %arg1: i32) -> (i32, i32) {
    %c0_i32 = arith.constant 0 : i32
    %c0_i32_0 = arith.constant 0 : i32
    %c0_i32_1 = arith.constant 0 : i32
    return %c0_i32, %c0_i32_0 : i32, i32
  }
  func.func @transform_2(%arg0: i32, %arg1: i32) -> (i32, i32) {
    %c0_i32 = arith.constant 0 : i32
    %c0_i32_0 = arith.constant 0 : i32
    %c0_i32_1 = arith.constant 0 : i32
    return %c0_i32, %c0_i32_0 : i32, i32
  }
  func.func @transform_3(%arg0: i32, %arg1: i32) -> (i32, i32, i32, i32) {
    %c0_i32 = arith.constant 0 : i32
    %c0_i32_0 = arith.constant 0 : i32
    %c0_i32_1 = arith.constant 0 : i32
    return %arg0, %c0_i32, %arg1, %c0_i32_0 : i32, i32, i32, i32
  }
  func.func @transform_4(%arg0: i32, %arg1: i32) -> (i32, i32, i32, i32) {
    %c0_i32 = arith.constant 0 : i32
    %c0_i32_0 = arith.constant 0 : i32
    %c0_i32_1 = arith.constant 0 : i32
    return %arg0, %c0_i32, %arg1, %c0_i32_0 : i32, i32, i32, i32
  }
  func.func @transform_5(%arg0: i32, %arg1: i32) -> (i32, i32, i32, i32) {
    %c0_i32 = arith.constant 0 : i32
    %c0_i32_0 = arith.constant 0 : i32
    %c0_i32_1 = arith.constant 0 : i32
    return %arg0, %c0_i32, %arg1, %c0_i32_0 : i32, i32, i32, i32
  }
}

</mosaic_0001>

<llo_original>
// kernel: tpu_custom_call.1
$region0: #{tpu_custom_call.1}
  #allocation0 [shape = 'u32[]', space=smem, size = 0x4, offset = 0x4, fixed_abs, tag = 'smem constant byte address 0x4 - core index']
  #allocation1 [shape = 'u32[144,128]{1,0:T(1,128)}', space=vmem, size = 0x12000, scoped, tag = 'internal scratch']
  %s0 = inlined_call_operand.hbm [shape: f32[2,8,32], index: 0, kind: input, shape index: {}]
  %s1 = inlined_call_operand.hbm [shape: f32[32,96], index: 1, kind: input, shape index: {}]
  %s2 = inlined_call_operand.vmem [shape: f32[1,96], index: 2, kind: input, shape index: {}]
  %s3 = inlined_call_operand.hbm [shape: f32[2,4,8,8], index: 3, kind: output, shape index: {0}]
  %s4 = inlined_call_operand.hbm [shape: f32[2,4,8,8], index: 4, kind: output, shape index: {1}]
  %s5 = inlined_call_operand.hbm [shape: f32[2,4,8,8], index: 5, kind: output, shape index: {2}]
  %6 = xla_tuple %s3, %s4, %s5
  %s7 = sld [smem:[#allocation0]]
  $region69: #{tpu_custom_call.1} parent=0
    _
  %s9 = ssub.s32 1, %s7
  %s10 = scalar_select 0, %s9, %s7
  $region1: #{tpu_custom_call.1} parent=0
    #allocation2 [shape = 'u8[8192]{0}', space=vmem, size = 0x2000, scoped, tag = 'input window, operand 0']
    #allocation3 [shape = 's32[2]{0}', space=sflag, size = 0x8, scoped, tag = 'scoped memory for tpu_custom_call.1']
    #allocation4 [shape = 's32[2]{0}', space=sflag, size = 0x8, scoped, tag = 'scoped memory for tpu_custom_call.1']
    #allocation5 [shape = 'u8[16384]{0}', space=vmem, size = 0x4000, scoped, tag = 'input window, operand 1, single buffered']
    #allocation6 [shape = 's32[1]{0}', space=sflag, size = 0x4, scoped, tag = 'scoped memory for tpu_custom_call.1']
    #allocation7 [shape = 'u8[32768]{0}', space=vmem, size = 0x8000, scoped, tag = 'output window, operand 0']
    #allocation8 [shape = 'u8[32768]{0}', space=vmem, size = 0x8000, scoped, tag = 'output window, operand 1']
    #allocation9 [shape = 's32[2]{0}', space=sflag, size = 0x8, scoped, tag = 'scoped memory for tpu_custom_call.1']
    #allocation10 [shape = 'u8[32768]{0}', space=vmem, size = 0x8000, scoped, tag = 'output window, operand 2']
    %11 = vsyncpa [#allocation3], 0
    %s12 = scalar_lea.sflag [#allocation3], 1
    %13 = vsyncpa %s12, 0
    %14 = vsyncpa [#allocation6], 0
    %15 = vsyncpa [#allocation4], 0
    %s16 = scalar_lea.sflag [#allocation4], 1
    %17 = vsyncpa %s16, 0
    %18 = vsyncpa [#allocation9], 0
    %s19 = scalar_lea.sflag [#allocation9], 1
    %20 = vsyncpa %s19, 0
    loop: start=0, step=1, limit=4
    $region2: #{tpu_custom_call.1} parent=1 // loop_pre_header
      _
    $region3: #{tpu_custom_call.1} parent=1 // loop_header
      %s22 = sphi 0, %s26
      %p23 = scmp.ge.s32.totalorder %s22, 4
      %s29 = sphi 0, %s41
      %s30 = sphi 0, %s37
      %s31 = sphi 0, %s29
      %s32 = sphi 0, %s30
      %s33 = sphi 0, %s31
      %s34 = sphi 0, %s32
      %s46 = sphi 0, %s48
      %s49 = sphi 0, %s46
      %s50 = sphi 0, %s49
      %s66 = sphi 0, %s50
      %s70 = sphi 0, %s70
      %s72 = sphi 0, %s70
      %s73 = sphi 0, %s72
      %s87 = sphi 0, %s73
      %s91 = sphi 0, %s91
      %s93 = sphi 0, %s91
      %s94 = sphi 0, %s93
      %s108 = sphi 0, %s94
      %s116 = sphi 0, %s118
      %s119 = sphi 0, %s116
      %s120 = sphi 0, %s119
      %s136 = sphi 0, %s120
      %s144 = sphi 0, %s146
      %s147 = sphi 0, %s144
      %s148 = sphi 0, %s147
      %s164 = sphi 0, %s148
      %s172 = sphi 0, %s174
      %s175 = sphi 0, %s172
      %s176 = sphi 0, %s175
      %s192 = sphi 0, %s176
    $region4: #{tpu_custom_call.1} parent=1 // loop_header_branch
      %25 = sbr.rel (%p23) target = $region8
    $region5: #{tpu_custom_call.1} parent=1 // loop_body
      %s27 = ssub.s32 %s22, 1
      %s28 = ssub.s32 %s22, 2
      %s35 = sadd.s32 1, %s30
      %p36 = scmp.ge.s32.totalorder %s35, 1
      %s37 = scalar_select %p36, 0, %s35
      %s38 = sadd.s32 1, %s29
      %s39 = scalar_select %p36, %s38, %s29
      %p40 = scmp.ge.s32.totalorder %s39, 2
      %s41 = scalar_select %p40, 0, %s39
      %s42 = ssub.s32 %s29, %s41
      %s43 = ssub.s32 %s30, %s37
      %s44 = sor.u32 %s42, %s43
      %p45 = scmp.eq.s32.totalorder %s44, 0
      %s47 = sadd.s32 %s46, 1
      %s48 = scalar_select %p45, %s46, %s47
      %p51 = pneg %p45
      %p52 = scmp.eq.s32.totalorder %s22, 1
      %p53 = por %p51, %p52
      %p54 = scmp.ne.s32.totalorder %s46, %s49
      %p55 = scmp.eq.s32.totalorder %s22, 0
      %p56 = por %p54, %p55
      %p57 = scmp.ne.s32.totalorder %s46, %s49
      %p58 = scmp.eq.s32.totalorder %s27, 1
      %p59 = por %p57, %p58
      %p60 = scmp.ne.s32.totalorder %s49, %s50
      %p61 = scmp.eq.s32.totalorder %s27, 0
      %p62 = por %p60, %p61
      %p63 = scmp.ne.s32.totalorder %s49, %s50
      %p64 = scmp.eq.s32.totalorder %s28, 1
      %p65 = por %p63, %p64
      %p67 = scmp.ne.s32.totalorder %s50, %s66
      %p68 = scmp.eq.s32.totalorder %s28, 0
      %p69 = por %p67, %p68
      %s71 = sadd.s32 %s70, 1
      %p74 = scmp.eq.s32.totalorder %s22, 1
      %p75 = scmp.ne.s32.totalorder %s70, %s72
      %p76 = scmp.eq.s32.totalorder %s22, 0
      %p77 = por %p75, %p76
      %p78 = scmp.ne.s32.totalorder %s70, %s72
      %p79 = scmp.eq.s32.totalorder %s27, 1
      %p80 = por %p78, %p79
      %p81 = scmp.ne.s32.totalorder %s72, %s73
      %p82 = scmp.eq.s32.totalorder %s27, 0
      %p83 = por %p81, %p82
      %p84 = scmp.ne.s32.totalorder %s72, %s73
      %p85 = scmp.eq.s32.totalorder %s28, 1
      %p86 = por %p84, %p85
      %p88 = scmp.ne.s32.totalorder %s73, %s87
      %p89 = scmp.eq.s32.totalorder %s28, 0
      %p90 = por %p88, %p89
      %s92 = sadd.s32 %s91, 1
      %p95 = scmp.eq.s32.totalorder %s22, 1
      %p96 = scmp.ne.s32.totalorder %s91, %s93
      %p97 = scmp.eq.s32.totalorder %s22, 0
      %p98 = por %p96, %p97
      %p99 = scmp.ne.s32.totalorder %s91, %s93
      %p100 = scmp.eq.s32.totalorder %s27, 1
      %p101 = por %p99, %p100
      %p102 = scmp.ne.s32.totalorder %s93, %s94
      %p103 = scmp.eq.s32.totalorder %s27, 0
      %p104 = por %p102, %p103
      %p105 = scmp.ne.s32.totalorder %s93, %s94
      %p106 = scmp.eq.s32.totalorder %s28, 1
      %p107 = por %p105, %p106
      %p109 = scmp.ne.s32.totalorder %s94, %s108
      %p110 = scmp.eq.s32.totalorder %s28, 0
      %p111 = por %p109, %p110
      %s112 = ssub.s32 %s29, %s41
      %s113 = ssub.s32 %s30, %s37
      %s114 = sor.u32 %s112, %s113
      %p115 = scmp.eq.s32.totalorder %s114, 0
      %s117 = sadd.s32 %s116, 1
      %s118 = scalar_select %p115, %s116, %s117
      %p121 = pneg %p115
      %p122 = scmp.eq.s32.totalorder %s22, 1
      %p123 = por %p121, %p122
      %p124 = scmp.ne.s32.totalorder %s116, %s119
      %p125 = scmp.eq.s32.totalorder %s22, 0
      %p126 = por %p124, %p125
      %p127 = scmp.ne.s32.totalorder %s116, %s119
      %p128 = scmp.eq.s32.totalorder %s27, 1
      %p129 = por %p127, %p128
      %p130 = scmp.ne.s32.totalorder %s119, %s120
      %p131 = scmp.eq.s32.totalorder %s27, 0
      %p132 = por %p130, %p131
      %p133 = scmp.ne.s32.totalorder %s119, %s120
      %p134 = scmp.eq.s32.totalorder %s28, 1
      %p135 = por %p133, %p134
      %p137 = scmp.ne.s32.totalorder %s120, %s136
      %p138 = scmp.eq.s32.totalorder %s28, 0
      %p139 = por %p137, %p138
      %s140 = ssub.s32 %s29, %s41
      %s141 = ssub.s32 %s30, %s37
      %s142 = sor.u32 %s140, %s141
      %p143 = scmp.eq.s32.totalorder %s142, 0
      %s145 = sadd.s32 %s144, 1
      %s146 = scalar_select %p143, %s144, %s145
      %p149 = pneg %p143
      %p150 = scmp.eq.s32.totalorder %s22, 1
      %p151 = por %p149, %p150
      %p152 = scmp.ne.s32.totalorder %s144, %s147
      %p153 = scmp.eq.s32.totalorder %s22, 0
      %p154 = por %p152, %p153
      %p155 = scmp.ne.s32.totalorder %s144, %s147
      %p156 = scmp.eq.s32.totalorder %s27, 1
      %p157 = por %p155, %p156
      %p158 = scmp.ne.s32.totalorder %s147, %s148
      %p159 = scmp.eq.s32.totalorder %s27, 0
      %p160 = por %p158, %p159
      %p161 = scmp.ne.s32.totalorder %s147, %s148
      %p162 = scmp.eq.s32.totalorder %s28, 1
      %p163 = por %p161, %p162
      %p165 = scmp.ne.s32.totalorder %s148, %s164
      %p166 = scmp.eq.s32.totalorder %s28, 0
      %p167 = por %p165, %p166
      %s168 = ssub.s32 %s29, %s41
      %s169 = ssub.s32 %s30, %s37
      %s170 = sor.u32 %s168, %s169
      %p171 = scmp.eq.s32.totalorder %s170, 0
      %s173 = sadd.s32 %s172, 1
      %s174 = scalar_select %p171, %s172, %s173
      %p177 = pneg %p171
      %p178 = scmp.eq.s32.totalorder %s22, 1
      %p179 = por %p177, %p178
      %p180 = scmp.ne.s32.totalorder %s172, %s175
      %p181 = scmp.eq.s32.totalorder %s22, 0
      %p182 = por %p180, %p181
      %p183 = scmp.ne.s32.totalorder %s172, %s175
      %p184 = scmp.eq.s32.totalorder %s27, 1
      %p185 = por %p183, %p184
      %p186 = scmp.ne.s32.totalorder %s175, %s176
      %p187 = scmp.eq.s32.totalorder %s27, 0
      %p188 = por %p186, %p187
      %p189 = scmp.ne.s32.totalorder %s175, %s176
      %p190 = scmp.eq.s32.totalorder %s28, 1
      %p191 = por %p189, %p190
      %p193 = scmp.ne.s32.totalorder %s176, %s192
      %p194 = scmp.eq.s32.totalorder %s28, 0
      %p195 = por %p193, %p194
      %p196 = scmp.le.s32.totalorder 1, %s22
      %p197 = scmp.lt.s32.totalorder %s22, 3
      %p198 = pnand %p196, %p197
      %p199 = pneg %p198
      // Predicated region
      $region9: #{tpu_custom_call.1} parent=5 // pred_check
        _
      $region10: #{tpu_custom_call.1} parent=5 // pred_check_branch
        %201 = sbr.rel (%p198) target = $region12
      $region11: #{tpu_custom_call.1} parent=5 // pred_region
        %s202 = ssub.s32 %s22, 1
        // Predicated region
        $region13: #{tpu_custom_call.1} parent=11 // pred_check
          %p203 = pneg %p83
        $region14: #{tpu_custom_call.1} parent=11 // pred_check_branch
          %205 = sbr.rel (%p203) target = $region16
        $region15: #{tpu_custom_call.1} parent=11 // pred_region
          %s207 = ssub.s32 512, 512
          %208 = vsyncadd [#allocation6], %s207
          %s209 = sshll.u32 [#allocation5], 4
          %s210 = int_to_ptr.vmem [resolvable:$true] %s209
          %215 = dma.hbm_to_vmem [thread:$0]  %s1, 512, %s210, [#allocation6], 128, 128, 8
        $region16: #{tpu_custom_call.1} parent=11 // pred_fallthru
          _
        // Predicated region
        $region17: #{tpu_custom_call.1} parent=11 // pred_check
          %p216 = pneg %p104
        $region18: #{tpu_custom_call.1} parent=11 // pred_check_branch
          %218 = sbr.rel (%p216) target = $region20
        $region19: #{tpu_custom_call.1} parent=11 // pred_region
          _
        $region20: #{tpu_custom_call.1} parent=11 // pred_fallthru
          _
      $region12: #{tpu_custom_call.1} parent=5 // pred_fallthru
        _
      %p219 = scmp.lt.s32.totalorder %s22, 2
      // Predicated region
      $region21: #{tpu_custom_call.1} parent=5 // pred_check
        %p220 = pneg %p219
      $region22: #{tpu_custom_call.1} parent=5 // pred_check_branch
        %222 = sbr.rel (%p220) target = $region24
      $region23: #{tpu_custom_call.1} parent=5 // pred_region
        // Predicated region
        $region25: #{tpu_custom_call.1} parent=23 // pred_check
          %p223 = pneg %p56
        $region26: #{tpu_custom_call.1} parent=23 // pred_check_branch
          %225 = sbr.rel (%p223) target = $region28
        $region27: #{tpu_custom_call.1} parent=23 // pred_region
          %s226 = sand.u32 %s46, 1
          %s227 = scalar_lea.sflag [#allocation3], %s226
          %s228 = sand.u32 %s46, 1
          %s229 = smul.addr %s228, 8
          %s230 = scalar_lea.vmem [#allocation2], %s229
          %s232 = ssub.s32 128, 128
          %233 = vsyncadd %s227, %s232
          %s234 = sadd.s32 %s30, %s29
          %s235 = smul.addr %s234, 128
          %s236 = scalar_lea.hbm %s0, %s235
          %s238 = sshll.u32 %s230, 4
          %s239 = int_to_ptr.vmem [resolvable:$true] %s238
          %241 = dma.hbm_to_vmem [thread:$0]  %s236, 128, %s239, %s227
        $region28: #{tpu_custom_call.1} parent=23 // pred_fallthru
          _
      $region24: #{tpu_custom_call.1} parent=5 // pred_fallthru
        _
      %p242 = scmp.le.s32.totalorder 1, %s22
      %p243 = scmp.lt.s32.totalorder %s22, 3
      %p244 = pnand %p242, %p243
      %p245 = pneg %p244
      // Predicated region
      $region29: #{tpu_custom_call.1} parent=5 // pred_check
        _
      $region30: #{tpu_custom_call.1} parent=5 // pred_check_branch
        %247 = sbr.rel (%p244) target = $region32
      $region31: #{tpu_custom_call.1} parent=5 // pred_region
        %s248 = ssub.s32 %s22, 1
        %s249 = sand.u32 %s49, 1
        %s250 = scalar_lea.sflag [#allocation3], %s249
        %s251 = sand.u32 %s49, 1
        %s252 = smul.addr %s251, 8
        %s253 = scalar_lea.vmem [#allocation2], %s252
        // Predicated region
        $region33: #{tpu_custom_call.1} parent=31 // pred_check
          %p254 = pneg %p62
        $region34: #{tpu_custom_call.1} parent=31 // pred_check_branch
          %256 = sbr.rel (%p254) target = $region36
        $region35: #{tpu_custom_call.1} parent=31 // pred_region
          %257 = dma.done %s250, 128
        $region36: #{tpu_custom_call.1} parent=31 // pred_fallthru
          _
        // Predicated region
        $region37: #{tpu_custom_call.1} parent=31 // pred_check
          %p258 = pneg %p83
        $region38: #{tpu_custom_call.1} parent=31 // pred_check_branch
          %260 = sbr.rel (%p258) target = $region40
        $region39: #{tpu_custom_call.1} parent=31 // pred_region
          %261 = dma.done [#allocation6], 512
        $region40: #{tpu_custom_call.1} parent=31 // pred_fallthru
          _
        %s262 = sand.u32 %s49, 1
        %s263 = scalar_lea.sflag [#allocation3], %s262
        %s264 = sand.u32 %s49, 1
        %s265 = smul.addr %s264, 8
        %s266 = scalar_lea.vmem [#allocation2], %s265
        %p267 = pneg %p62
        %p268 = pneg %p59
        %p269 = pneg %p83
        %p270 = pneg %p80
        %p271 = pneg %p104
        %p272 = pneg %p101
        %p273 = pneg %p132
        %p274 = pneg %p129
        %s275 = sand.u32 %s119, 1
        %s276 = scalar_lea.sflag [#allocation4], %s275
        %s277 = sand.u32 %s119, 1
        %s278 = smul.addr %s277, 32
        %s279 = scalar_lea.vmem [#allocation7], %s278
        %p280 = pneg %p160
        %p281 = pneg %p157
        %s282 = sand.u32 %s27, 1
        %s283 = scalar_lea.sflag [#allocation9], %s282
        %s284 = sand.u32 %s147, 1
        %s285 = smul.addr %s284, 32
        %s286 = scalar_lea.vmem [#allocation8], %s285
        %p287 = pneg %p188
        %p288 = pneg %p185
        %s289 = sand.u32 %s27, 1
        %s290 = scalar_lea.sflag [#allocation9], %s289
        %s291 = sand.u32 %s175, 1
        %s292 = smul.addr %s291, 32
        %s293 = scalar_lea.vmem [#allocation10], %s292
        %v294 = vld [vmem:[%s253] sm:$0xff]
        %v295 = vld [vmem:[#allocation5] sm:$0xff]
        %v296 = vld [vmem:[#allocation5 + $0x8] sm:$0xff]
        %v297 = vld [vmem:[#allocation5 + $0x10] sm:$0xff]
        %v298 = vld [vmem:[#allocation5 + $0x18] sm:$0xff]
        %v299 = vld [vmem:[%s2] sm:$0x1]
        %v301 = vlaneseq
        %v302 = vshrl.u32 %v301, 7
        %v303 = vsub.s32 0, %v302
        %v304 = vrot.slane %v299, %v303
        %vm306 = vcmask 261120
        %v308 = vsel %vm306, %v294, 0
        %310 = vmatprep.subr.mxu0 0.0
        %311 = vmatpush1.msra.mxu0 %v295
        %312 = vmatprep.subr.mxu0 0.0
        %313 = vmatpush1.msra.mxu0 %v296
        %314 = vmatprep.subr.mxu0 0.0
        %315 = vmatpush1.msra.mxu0 %v297
        %316 = vmatprep.subr.mxu0 0.0
        %317 = vmatpush1.msra.mxu0 %v298
        %318 = vmatprep.subr.mxu0 0.0
        %319 = vmatpush1.msra.mxu0 0.0
        %320 = vmatprep.subr.mxu0 0.0
        %321 = vmatpush1.msra.mxu0 0.0
        %322 = vmatprep.subr.mxu0 0.0
        %323 = vmatpush1.msra.mxu0 0.0
        %324 = vmatprep.subr.mxu0 0.0
        %325 = vmatpush1.msra.mxu0 0.0
        %326 = vmatprep.subr.mxu0 0.0
        %327 = vmatpush1.msra.mxu0 0.0
        %328 = vmatprep.subr.mxu0 0.0
        %329 = vmatpush1.msra.mxu0 0.0
        %330 = vmatprep.subr.mxu0 0.0
        %331 = vmatpush1.msra.mxu0 0.0
        %332 = vmatprep.subr.mxu0 0.0
        %333 = vmatpush1.msra.mxu0 0.0
        %334 = vmatprep.subr.mxu0 0.0
        %335 = vmatpush1.msra.mxu0 0.0
        %336 = vmatprep.subr.mxu0 0.0
        %337 = vmatpush1.msra.mxu0 0.0
        %338 = vmatprep.subr.mxu0 0.0
        %339 = vmatpush1.msra.mxu0 0.0
        %340 = vmatprep.subr.mxu0 0.0
        %341 = vmatpush1.msra.mxu0 0.0
        %342 = vmatprep.subr.mxu0 0.0
        %343 = vmatpush1.msra.mxu0 0.0
        %344 = vmatprep.subr.mxu0 0.0
        %345 = vmatpush1.msra.mxu0 0.0
        %346 = vmatprep.subr.mxu0 0.0
        %347 = vmatpush1.msra.mxu0 0.0
        %348 = vmatprep.subr.mxu0 0.0
        %349 = vmatpush1.msra.mxu0 0.0
        %350 = vmatprep.subr.mxu0 0.0
        %351 = vmatpush1.msra.mxu0 0.0
        %352 = vmatprep.subr.mxu0 0.0
        %353 = vmatpush1.msra.mxu0 0.0
        %354 = vmatprep.subr.mxu0 0.0
        %355 = vmatpush1.msra.mxu0 0.0
        %356 = vmatprep.subr.mxu0 0.0
        %357 = vmatpush1.msra.mxu0 0.0
        %358 = vmatprep.subr.mxu0 0.0
        %359 = vmatpush1.msra.mxu0 0.0
        %360 = vmatprep.subr.mxu0 0.0
        %361 = vmatpush1.msra.mxu0 0.0
        %362 = vmatprep.subr.mxu0 0.0
        %363 = vmatpush1.msra.mxu0 0.0
        %364 = vmatprep.subr.mxu0 0.0
        %365 = vmatpush1.msra.mxu0 0.0
        %366 = vmatprep.subr.mxu0 0.0
        %367 = vmatpush1.msra.mxu0 0.0
        %368 = vmatprep.subr.mxu0 0.0
        %369 = vmatpush1.msra.mxu0 0.0
        %370 = vmatprep.subr.mxu0 0.0
        %371 = vmatpush1.msra.mxu0 0.0
        %372 = vmatprep.subr.mxu0 0.0
        %373 = vmatpush1.msra.mxu0 0.0
        %374 = vmatprep.mubr.f32.mxu0 0.0
        %375 = vmatmul.mubr.f32.gmra.mrb[0].mxu0 %v308
        %v376 = vpop.f32.mrb[0].mxu0
        %v377 = vadd.f32 %v304, %v376
        %v378 = vpop.f32.mrb[0].mxu0
        %379 = vdwg.mxu0
        %381 = vrot.lane.b32.xlu0 %v377, 120
        %v382 = vpop.permute.xlu0 %381
        %384 = vrot.lane.b32.xlu0 %v377, 112
        %v385 = vpop.permute.xlu0 %384
        %387 = vrot.lane.b32.xlu0 %v377, 104
        %v388 = vpop.permute.xlu0 %387
        %v390 = vcombine.low %v377, %v385
        %v391 = vcombine.high %v377, %v385
        %v393 = vunpack.c.l.s4 1983009808
        %v394 = vunpack.c.0.s8 %v393
        %v395 = vlaneseq
        %v396 = vshrl.u32 %v395, 7
        %v397 = vsub.s32 %v394, %v396
        %v398 = vrot.slane %v390, %v397
        %v400 = vunpack.c.l.s4 1983009808
        %v401 = vunpack.c.0.s8 %v400
        %v402 = vlaneseq
        %v403 = vshrl.u32 %v402, 7
        %v404 = vsub.s32 %v401, %v403
        %v405 = vrot.slane %v391, %v404
        %v406 = vcombine.low %v382, %v388
        %v407 = vcombine.high %v382, %v388
        %v409 = vunpack.c.l.s4 1983009808
        %v410 = vunpack.c.0.s8 %v409
        %v411 = vlaneseq
        %v412 = vshrl.u32 %v411, 7
        %v413 = vsub.s32 %v410, %v412
        %v414 = vrot.slane %v406, %v413
        %v416 = vunpack.c.l.s4 1983009808
        %v417 = vunpack.c.0.s8 %v416
        %v418 = vlaneseq
        %v419 = vshrl.u32 %v418, 7
        %v420 = vsub.s32 %v417, %v419
        %v421 = vrot.slane %v407, %v420
        %v422 = vcombine.low %v398, %v414
        %v423 = vcombine.high %v398, %v414
        %v425 = vunpack.c.l.s4 1934713408
        %v426 = vunpack.c.0.s8 %v425
        %v427 = vlaneseq
        %v428 = vshrl.u32 %v427, 7
        %v429 = vsub.s32 %v426, %v428
        %v430 = vrot.slane %v422, %v429
        %v432 = vunpack.c.l.s4 1934713408
        %v433 = vunpack.c.0.s8 %v432
        %v434 = vlaneseq
        %v435 = vshrl.u32 %v434, 7
        %v436 = vsub.s32 %v433, %v435
        %v437 = vrot.slane %v423, %v436
        %v438 = vcombine.low %v405, %v421
        %v439 = vcombine.high %v405, %v421
        %v441 = vunpack.c.l.s4 1934713408
        %v442 = vunpack.c.0.s8 %v441
        %v443 = vlaneseq
        %v444 = vshrl.u32 %v443, 7
        %v445 = vsub.s32 %v442, %v444
        %v446 = vrot.slane %v438, %v445
        %v448 = vunpack.c.l.s4 1934713408
        %v449 = vunpack.c.0.s8 %v448
        %v450 = vlaneseq
        %v451 = vshrl.u32 %v450, 7
        %v452 = vsub.s32 %v449, %v451
        %v453 = vrot.slane %v439, %v452
        %v454 = vcombine.high %v430, 0.0
        %v455 = vcombine.high %v437, 0.0
        %v456 = vcombine.high %v446, 0.0
        %v457 = vcombine.high %v453, 0.0
        %v458 = vcombine.low %v430, %v437
        %v460 = vunpack.c.l.s4 1983009808
        %v461 = vunpack.c.0.s8 %v460
        %v462 = vlaneseq
        %v463 = vshrl.u32 %v462, 7
        %v464 = vsub.s32 %v461, %v463
        %v465 = vrot.slane %v458, %v464
        %v466 = vcombine.low %v454, %v455
        %v468 = vunpack.c.l.s4 1983009808
        %v469 = vunpack.c.0.s8 %v468
        %v470 = vlaneseq
        %v471 = vshrl.u32 %v470, 7
        %v472 = vsub.s32 %v469, %v471
        %v473 = vrot.slane %v466, %v472
        %v474 = vcombine.low %v446, %v453
        %v476 = vunpack.c.l.s4 1983009808
        %v477 = vunpack.c.0.s8 %v476
        %v478 = vlaneseq
        %v479 = vshrl.u32 %v478, 7
        %v480 = vsub.s32 %v477, %v479
        %v481 = vrot.slane %v474, %v480
        %v482 = vcombine.low %v456, %v457
        %v484 = vunpack.c.l.s4 1983009808
        %v485 = vunpack.c.0.s8 %v484
        %v486 = vlaneseq
        %v487 = vshrl.u32 %v486, 7
        %v488 = vsub.s32 %v485, %v487
        %v489 = vrot.slane %v482, %v488
        %v490 = vcombine.low %v465, %v473
        %v491 = vcombine.high %v465, %v473
        %v493 = vunpack.c.l.s4 1934713408
        %v494 = vunpack.c.0.s8 %v493
        %v495 = vlaneseq
        %v496 = vshrl.u32 %v495, 7
        %v497 = vsub.s32 %v494, %v496
        %v498 = vrot.slane %v490, %v497
        %v500 = vunpack.c.l.s4 1934713408
        %v501 = vunpack.c.0.s8 %v500
        %v502 = vlaneseq
        %v503 = vshrl.u32 %v502, 7
        %v504 = vsub.s32 %v501, %v503
        %v505 = vrot.slane %v491, %v504
        %v506 = vcombine.low %v481, %v489
        %v507 = vcombine.high %v481, %v489
        %v509 = vunpack.c.l.s4 1934713408
        %v510 = vunpack.c.0.s8 %v509
        %v511 = vlaneseq
        %v512 = vshrl.u32 %v511, 7
        %v513 = vsub.s32 %v510, %v512
        %v514 = vrot.slane %v506, %v513
        %v516 = vunpack.c.l.s4 1934713408
        %v517 = vunpack.c.0.s8 %v516
        %v518 = vlaneseq
        %v519 = vshrl.u32 %v518, 7
        %v520 = vsub.s32 %v517, %v519
        %v521 = vrot.slane %v507, %v520
        %v522 = vcombine.low %v498, %v514
        %v523 = vcombine.high %v498, %v514
        %v524 = vcombine.low %v505, %v521
        %v525 = vcombine.high %v505, %v521
        %vm526 = vcmask 64512
        %527 = vst.msk [vmem:[%s279] sm:$0xff] %vm526, %v522
        %528 = vst.msk [vmem:[%s279 + $0x8] sm:$0xff] %vm526, %v523
        %529 = vst.msk [vmem:[%s279 + $0x10] sm:$0xff] %vm526, %v524
        %530 = vst.msk [vmem:[%s279 + $0x18] sm:$0xff] %vm526, %v525
        %531 = vrot.lane.b32.xlu0 %v377, 96
        %v532 = vpop.permute.xlu0 %531
        %533 = vrot.lane.b32.xlu0 %v382, 96
        %v534 = vpop.permute.xlu0 %533
        %535 = vrot.lane.b32.xlu0 %v385, 96
        %v536 = vpop.permute.xlu0 %535
        %537 = vrot.lane.b32.xlu0 %v388, 96
        %v538 = vpop.permute.xlu0 %537
        %v543 = vcombine.low %v532, %v536
        %v544 = vcombine.high %v532, %v536
        %v546 = vunpack.c.l.s4 1983009808
        %v547 = vunpack.c.0.s8 %v546
        %v548 = vlaneseq
        %v549 = vshrl.u32 %v548, 7
        %v550 = vsub.s32 %v547, %v549
        %v551 = vrot.slane %v543, %v550
        %v553 = vunpack.c.l.s4 1983009808
        %v554 = vunpack.c.0.s8 %v553
        %v555 = vlaneseq
        %v556 = vshrl.u32 %v555, 7
        %v557 = vsub.s32 %v554, %v556
        %v558 = vrot.slane %v544, %v557
        %v559 = vcombine.low %v534, %v538
        %v560 = vcombine.high %v534, %v538
        %v562 = vunpack.c.l.s4 1983009808
        %v563 = vunpack.c.0.s8 %v562
        %v564 = vlaneseq
        %v565 = vshrl.u32 %v564, 7
        %v566 = vsub.s32 %v563, %v565
        %v567 = vrot.slane %v559, %v566
        %v569 = vunpack.c.l.s4 1983009808
        %v570 = vunpack.c.0.s8 %v569
        %v571 = vlaneseq
        %v572 = vshrl.u32 %v571, 7
        %v573 = vsub.s32 %v570, %v572
        %v574 = vrot.slane %v560, %v573
        %v575 = vcombine.low %v551, %v567
        %v576 = vcombine.high %v551, %v567
        %v578 = vunpack.c.l.s4 1934713408
        %v579 = vunpack.c.0.s8 %v578
        %v580 = vlaneseq
        %v581 = vshrl.u32 %v580, 7
        %v582 = vsub.s32 %v579, %v581
        %v583 = vrot.slane %v575, %v582
        %v585 = vunpack.c.l.s4 1934713408
        %v586 = vunpack.c.0.s8 %v585
        %v587 = vlaneseq
        %v588 = vshrl.u32 %v587, 7
        %v589 = vsub.s32 %v586, %v588
        %v590 = vrot.slane %v576, %v589
        %v591 = vcombine.low %v558, %v574
        %v592 = vcombine.high %v558, %v574
        %v594 = vunpack.c.l.s4 1934713408
        %v595 = vunpack.c.0.s8 %v594
        %v596 = vlaneseq
        %v597 = vshrl.u32 %v596, 7
        %v598 = vsub.s32 %v595, %v597
        %v599 = vrot.slane %v591, %v598
        %v601 = vunpack.c.l.s4 1934713408
        %v602 = vunpack.c.0.s8 %v601
        %v603 = vlaneseq
        %v604 = vshrl.u32 %v603, 7
        %v605 = vsub.s32 %v602, %v604
        %v606 = vrot.slane %v592, %v605
        %v607 = vcombine.high %v583, 0.0
        %v608 = vcombine.high %v590, 0.0
        %v609 = vcombine.high %v599, 0.0
        %v610 = vcombine.high %v606, 0.0
        %v611 = vcombine.low %v583, %v590
        %v613 = vunpack.c.l.s4 1983009808
        %v614 = vunpack.c.0.s8 %v613
        %v615 = vlaneseq
        %v616 = vshrl.u32 %v615, 7
        %v617 = vsub.s32 %v614, %v616
        %v618 = vrot.slane %v611, %v617
        %v619 = vcombine.low %v607, %v608
        %v621 = vunpack.c.l.s4 1983009808
        %v622 = vunpack.c.0.s8 %v621
        %v623 = vlaneseq
        %v624 = vshrl.u32 %v623, 7
        %v625 = vsub.s32 %v622, %v624
        %v626 = vrot.slane %v619, %v625
        %v627 = vcombine.low %v599, %v606
        %v629 = vunpack.c.l.s4 1983009808
        %v630 = vunpack.c.0.s8 %v629
        %v631 = vlaneseq
        %v632 = vshrl.u32 %v631, 7
        %v633 = vsub.s32 %v630, %v632
        %v634 = vrot.slane %v627, %v633
        %v635 = vcombine.low %v609, %v610
        %v637 = vunpack.c.l.s4 1983009808
        %v638 = vunpack.c.0.s8 %v637
        %v639 = vlaneseq
        %v640 = vshrl.u32 %v639, 7
        %v641 = vsub.s32 %v638, %v640
        %v642 = vrot.slane %v635, %v641
        %v643 = vcombine.low %v618, %v626
        %v644 = vcombine.high %v618, %v626
        %v646 = vunpack.c.l.s4 1934713408
        %v647 = vunpack.c.0.s8 %v646
        %v648 = vlaneseq
        %v649 = vshrl.u32 %v648, 7
        %v650 = vsub.s32 %v647, %v649
        %v651 = vrot.slane %v643, %v650
        %v653 = vunpack.c.l.s4 1934713408
        %v654 = vunpack.c.0.s8 %v653
        %v655 = vlaneseq
        %v656 = vshrl.u32 %v655, 7
        %v657 = vsub.s32 %v654, %v656
        %v658 = vrot.slane %v644, %v657
        %v659 = vcombine.low %v634, %v642
        %v660 = vcombine.high %v634, %v642
        %v662 = vunpack.c.l.s4 1934713408
        %v663 = vunpack.c.0.s8 %v662
        %v664 = vlaneseq
        %v665 = vshrl.u32 %v664, 7
        %v666 = vsub.s32 %v663, %v665
        %v667 = vrot.slane %v659, %v666
        %v669 = vunpack.c.l.s4 1934713408
        %v670 = vunpack.c.0.s8 %v669
        %v671 = vlaneseq
        %v672 = vshrl.u32 %v671, 7
        %v673 = vsub.s32 %v670, %v672
        %v674 = vrot.slane %v660, %v673
        %v675 = vcombine.low %v651, %v667
        %v676 = vcombine.high %v651, %v667
        %v677 = vcombine.low %v658, %v674
        %v678 = vcombine.high %v658, %v674
        %679 = vst.msk [vmem:[%s286] sm:$0xff] %vm526, %v675
        %680 = vst.msk [vmem:[%s286 + $0x8] sm:$0xff] %vm526, %v676
        %681 = vst.msk [vmem:[%s286 + $0x10] sm:$0xff] %vm526, %v677
        %682 = vst.msk [vmem:[%s286 + $0x18] sm:$0xff] %vm526, %v678
        %683 = vrot.lane.b32.xlu0 %v377, 64
        %v684 = vpop.permute.xlu0 %683
        %685 = vrot.lane.b32.xlu0 %v382, 64
        %v686 = vpop.permute.xlu0 %685
        %687 = vrot.lane.b32.xlu0 %v385, 64
        %v688 = vpop.permute.xlu0 %687
        %689 = vrot.lane.b32.xlu0 %v388, 64
        %v690 = vpop.permute.xlu0 %689
        %v695 = vcombine.low %v684, %v688
        %v696 = vcombine.high %v684, %v688
        %v698 = vunpack.c.l.s4 1983009808
        %v699 = vunpack.c.0.s8 %v698
        %v700 = vlaneseq
        %v701 = vshrl.u32 %v700, 7
        %v702 = vsub.s32 %v699, %v701
        %v703 = vrot.slane %v695, %v702
        %v705 = vunpack.c.l.s4 1983009808
        %v706 = vunpack.c.0.s8 %v705
        %v707 = vlaneseq
        %v708 = vshrl.u32 %v707, 7
        %v709 = vsub.s32 %v706, %v708
        %v710 = vrot.slane %v696, %v709
        %v711 = vcombine.low %v686, %v690
        %v712 = vcombine.high %v686, %v690
        %v714 = vunpack.c.l.s4 1983009808
        %v715 = vunpack.c.0.s8 %v714
        %v716 = vlaneseq
        %v717 = vshrl.u32 %v716, 7
        %v718 = vsub.s32 %v715, %v717
        %v719 = vrot.slane %v711, %v718
        %v721 = vunpack.c.l.s4 1983009808
        %v722 = vunpack.c.0.s8 %v721
        %v723 = vlaneseq
        %v724 = vshrl.u32 %v723, 7
        %v725 = vsub.s32 %v722, %v724
        %v726 = vrot.slane %v712, %v725
        %v727 = vcombine.low %v703, %v719
        %v728 = vcombine.high %v703, %v719
        %v730 = vunpack.c.l.s4 1934713408
        %v731 = vunpack.c.0.s8 %v730
        %v732 = vlaneseq
        %v733 = vshrl.u32 %v732, 7
        %v734 = vsub.s32 %v731, %v733
        %v735 = vrot.slane %v727, %v734
        %v737 = vunpack.c.l.s4 1934713408
        %v738 = vunpack.c.0.s8 %v737
        %v739 = vlaneseq
        %v740 = vshrl.u32 %v739, 7
        %v741 = vsub.s32 %v738, %v740
        %v742 = vrot.slane %v728, %v741
        %v743 = vcombine.low %v710, %v726
        %v744 = vcombine.high %v710, %v726
        %v746 = vunpack.c.l.s4 1934713408
        %v747 = vunpack.c.0.s8 %v746
        %v748 = vlaneseq
        %v749 = vshrl.u32 %v748, 7
        %v750 = vsub.s32 %v747, %v749
        %v751 = vrot.slane %v743, %v750
        %v753 = vunpack.c.l.s4 1934713408
        %v754 = vunpack.c.0.s8 %v753
        %v755 = vlaneseq
        %v756 = vshrl.u32 %v755, 7
        %v757 = vsub.s32 %v754, %v756
        %v758 = vrot.slane %v744, %v757
        %v759 = vcombine.high %v735, 0.0
        %v760 = vcombine.high %v742, 0.0
        %v761 = vcombine.high %v751, 0.0
        %v762 = vcombine.high %v758, 0.0
        %v763 = vcombine.low %v735, %v742
        %v765 = vunpack.c.l.s4 1983009808
        %v766 = vunpack.c.0.s8 %v765
        %v767 = vlaneseq
        %v768 = vshrl.u32 %v767, 7
        %v769 = vsub.s32 %v766, %v768
        %v770 = vrot.slane %v763, %v769
        %v771 = vcombine.low %v759, %v760
        %v773 = vunpack.c.l.s4 1983009808
        %v774 = vunpack.c.0.s8 %v773
        %v775 = vlaneseq
        %v776 = vshrl.u32 %v775, 7
        %v777 = vsub.s32 %v774, %v776
        %v778 = vrot.slane %v771, %v777
        %v779 = vcombine.low %v751, %v758
        %v781 = vunpack.c.l.s4 1983009808
        %v782 = vunpack.c.0.s8 %v781
        %v783 = vlaneseq
        %v784 = vshrl.u32 %v783, 7
        %v785 = vsub.s32 %v782, %v784
        %v786 = vrot.slane %v779, %v785
        %v787 = vcombine.low %v761, %v762
        %v789 = vunpack.c.l.s4 1983009808
        %v790 = vunpack.c.0.s8 %v789
        %v791 = vlaneseq
        %v792 = vshrl.u32 %v791, 7
        %v793 = vsub.s32 %v790, %v792
        %v794 = vrot.slane %v787, %v793
        %v795 = vcombine.low %v770, %v778
        %v796 = vcombine.high %v770, %v778
        %v798 = vunpack.c.l.s4 1934713408
        %v799 = vunpack.c.0.s8 %v798
        %v800 = vlaneseq
        %v801 = vshrl.u32 %v800, 7
        %v802 = vsub.s32 %v799, %v801
        %v803 = vrot.slane %v795, %v802
        %v805 = vunpack.c.l.s4 1934713408
        %v806 = vunpack.c.0.s8 %v805
        %v807 = vlaneseq
        %v808 = vshrl.u32 %v807, 7
        %v809 = vsub.s32 %v806, %v808
        %v810 = vrot.slane %v796, %v809
        %v811 = vcombine.low %v786, %v794
        %v812 = vcombine.high %v786, %v794
        %v814 = vunpack.c.l.s4 1934713408
        %v815 = vunpack.c.0.s8 %v814
        %v816 = vlaneseq
        %v817 = vshrl.u32 %v816, 7
        %v818 = vsub.s32 %v815, %v817
        %v819 = vrot.slane %v811, %v818
        %v821 = vunpack.c.l.s4 1934713408
        %v822 = vunpack.c.0.s8 %v821
        %v823 = vlaneseq
        %v824 = vshrl.u32 %v823, 7
        %v825 = vsub.s32 %v822, %v824
        %v826 = vrot.slane %v812, %v825
        %v827 = vcombine.low %v803, %v819
        %v828 = vcombine.high %v803, %v819
        %v829 = vcombine.low %v810, %v826
        %v830 = vcombine.high %v810, %v826
        %831 = vst.msk [vmem:[%s293] sm:$0xff] %vm526, %v827
        %832 = vst.msk [vmem:[%s293 + $0x8] sm:$0xff] %vm526, %v828
        %833 = vst.msk [vmem:[%s293 + $0x10] sm:$0xff] %vm526, %v829
        %834 = vst.msk [vmem:[%s293 + $0x18] sm:$0xff] %vm526, %v830
        %s835 = sand.u32 %s119, 1
        %s836 = scalar_lea.sflag [#allocation4], %s835
        %s837 = sand.u32 %s119, 1
        %s838 = smul.addr %s837, 32
        %s839 = scalar_lea.vmem [#allocation7], %s838
        %s840 = sand.u32 %s27, 1
        %s841 = scalar_lea.sflag [#allocation9], %s840
        %s842 = sand.u32 %s147, 1
        %s843 = smul.addr %s842, 32
        %s844 = scalar_lea.vmem [#allocation8], %s843
        %s845 = sand.u32 %s27, 1
        %s846 = scalar_lea.sflag [#allocation9], %s845
        %s847 = sand.u32 %s175, 1
        %s848 = smul.addr %s847, 32
        %s849 = scalar_lea.vmem [#allocation10], %s848
        // Predicated region
        $region41: #{tpu_custom_call.1} parent=31 // pred_check
          %p850 = pneg %p129
        $region42: #{tpu_custom_call.1} parent=31 // pred_check_branch
          %852 = sbr.rel (%p850) target = $region44
        $region43: #{tpu_custom_call.1} parent=31 // pred_region
          %s854 = ssub.s32 512, 512
          %855 = vsyncadd %s836, %s854
          %s856 = smul.addr %s31, 4
          %s857 = sadd.s32 %s32, %s856
          %s858 = smul.addr %s857, 128
          %s859 = scalar_lea.hbm %s3, %s858
          %s860 = sshll.u32 %s839, 4
          %s861 = int_to_ptr.vmem [resolvable:$true] %s860
          %866 = dma.vmem_to_hbm [thread:$0]  %s861, 512, %s859, %s836, 128, 128, 8
        $region44: #{tpu_custom_call.1} parent=31 // pred_fallthru
          _
        // Predicated region
        $region45: #{tpu_custom_call.1} parent=31 // pred_check
          %p867 = pneg %p157
        $region46: #{tpu_custom_call.1} parent=31 // pred_check_branch
          %869 = sbr.rel (%p867) target = $region48
        $region47: #{tpu_custom_call.1} parent=31 // pred_region
          %s871 = ssub.s32 512, 512
          %872 = vsyncadd %s841, %s871
          %s873 = smul.addr %s31, 4
          %s874 = sadd.s32 %s32, %s873
          %s875 = smul.addr %s874, 128
          %s876 = scalar_lea.hbm %s4, %s875
          %s877 = sshll.u32 %s844, 4
          %s878 = int_to_ptr.vmem [resolvable:$true] %s877
          %883 = dma.vmem_to_hbm [thread:$0]  %s878, 512, %s876, %s841, 128, 128, 8
        $region48: #{tpu_custom_call.1} parent=31 // pred_fallthru
          _
        // Predicated region
        $region49: #{tpu_custom_call.1} parent=31 // pred_check
          %p884 = pneg %p185
        $region50: #{tpu_custom_call.1} parent=31 // pred_check_branch
          %886 = sbr.rel (%p884) target = $region52
        $region51: #{tpu_custom_call.1} parent=31 // pred_region
          %s888 = ssub.s32 512, 512
          %889 = vsyncadd %s846, %s888
          %s890 = smul.addr %s31, 4
          %s891 = sadd.s32 %s32, %s890
          %s892 = smul.addr %s891, 128
          %s893 = scalar_lea.hbm %s5, %s892
          %s894 = sshll.u32 %s849, 4
          %s895 = int_to_ptr.vmem [resolvable:$true] %s894
          %900 = dma.vmem_to_hbm [thread:$0]  %s895, 512, %s893, %s846, 128, 128, 8
        $region52: #{tpu_custom_call.1} parent=31 // pred_fallthru
          _
      $region32: #{tpu_custom_call.1} parent=5 // pred_fallthru
        _
      %p901 = scmp.le.s32.totalorder 2, %s22
      // Predicated region
      $region53: #{tpu_custom_call.1} parent=5 // pred_check
        %p902 = pneg %p901
      $region54: #{tpu_custom_call.1} parent=5 // pred_check_branch
        %904 = sbr.rel (%p902) target = $region56
      $region55: #{tpu_custom_call.1} parent=5 // pred_region
        %s905 = ssub.s32 %s22, 2
        // Predicated region
        $region57: #{tpu_custom_call.1} parent=55 // pred_check
          %p906 = pneg %p135
        $region58: #{tpu_custom_call.1} parent=55 // pred_check_branch
          %908 = sbr.rel (%p906) target = $region60
        $region59: #{tpu_custom_call.1} parent=55 // pred_region
          %s909 = sand.u32 %s120, 1
          %s910 = scalar_lea.sflag [#allocation4], %s909
          %s911 = sand.u32 %s120, 1
          %s912 = smul.addr %s911, 32
          %s913 = scalar_lea.vmem [#allocation7], %s912
          %914 = dma.done %s910, 512
        $region60: #{tpu_custom_call.1} parent=55 // pred_fallthru
          _
        // Predicated region
        $region61: #{tpu_custom_call.1} parent=55 // pred_check
          %p915 = pneg %p163
        $region62: #{tpu_custom_call.1} parent=55 // pred_check_branch
          %917 = sbr.rel (%p915) target = $region64
        $region63: #{tpu_custom_call.1} parent=55 // pred_region
          %s918 = sand.u32 %s28, 1
          %s919 = scalar_lea.sflag [#allocation9], %s918
          %s920 = sand.u32 %s148, 1
          %s921 = smul.addr %s920, 32
          %s922 = scalar_lea.vmem [#allocation8], %s921
          %923 = dma.done %s919, 512
        $region64: #{tpu_custom_call.1} parent=55 // pred_fallthru
          _
        // Predicated region
        $region65: #{tpu_custom_call.1} parent=55 // pred_check
          %p924 = pneg %p191
        $region66: #{tpu_custom_call.1} parent=55 // pred_check_branch
          %926 = sbr.rel (%p924) target = $region68
        $region67: #{tpu_custom_call.1} parent=55 // pred_region
          %s927 = sand.u32 %s28, 1
          %s928 = scalar_lea.sflag [#allocation9], %s927
          %s929 = sand.u32 %s176, 1
          %s930 = smul.addr %s929, 32
          %s931 = scalar_lea.vmem [#allocation10], %s930
          %932 = dma.done %s928, 512
        $region68: #{tpu_custom_call.1} parent=55 // pred_fallthru
          _
      $region56: #{tpu_custom_call.1} parent=5 // pred_fallthru
        _
    $region6: #{tpu_custom_call.1} parent=1 // loop_footer
      %s26 = sadd.s32 1, %s22
    $region7: #{tpu_custom_call.1} parent=1 // loop_footer_branch
      %21 = sbr.rel target = $region3
    $region8: #{tpu_custom_call.1} parent=1 // loop_exit
      _
    %933 = vsyncpa [#allocation3], 1
    %s934 = scalar_lea.sflag [#allocation3], 1
    %935 = vsyncpa %s934, 1
    %936 = vsyncpa [#allocation6], 1
    %937 = vsyncpa [#allocation4], 1
    %s938 = scalar_lea.sflag [#allocation4], 1
    %939 = vsyncpa %s938, 1
    %940 = vsyncpa [#allocation9], 1
    %s941 = scalar_lea.sflag [#allocation9], 1
    %942 = vsyncpa %s941, 1

</llo_original>
